<compile_context>
chip_gen: v7x
topology: tpu7x:2x2x1
jax: 0.10.0
libtpu: 0.0.40
codegen_flags: <defaults>
</compile_context>

<pallas_src>
import jax
import jax.numpy as jnp
from jax.experimental import pallas as pl
from jax.experimental.pallas import tpu as pltpu


def dqn_kernel(x_ref, w1_ref, b1_ref, w2_ref, b2_ref, w3_ref, b3_ref, o_ref):
    # x_ref: (n_state, block_B) bf16 tile, feature-major -> lane dim = batch.
    x = x_ref[...]

    # Layer 1: (128, n_state) @ (n_state, bb), bf16 MXU, f32 accumulation,
    # bf16 bias-add / ReLU epilogue.
    h1 = jnp.dot(w1_ref[...], x, preferred_element_type=jnp.float32)
    h1 = jnp.maximum(h1.astype(jnp.bfloat16) + b1_ref[...], 0)

    # Layer 2: (32, 128) @ (128, bb).
    h2 = jnp.dot(w2_ref[...], h1, preferred_element_type=jnp.float32)
    h2 = jnp.maximum(h2.astype(jnp.bfloat16) + b2_ref[...], 0)

    # Layer 3: (2, 32) @ (32, bb); keep the tiny final bias-add in f32.
    out = jnp.dot(w3_ref[...], h2, preferred_element_type=jnp.float32) + b3_ref[...]
    o_ref[...] = out.astype(o_ref.dtype)


def _round_up(a, m):
    return (a + m - 1) // m * m


def _pick_tile(batch, block_b):
    """Lane-aligned batch tile and padded batch; prefer >=2 grid steps."""
    b128 = _round_up(max(batch, 1), 128)            # minimum lane-aligned batch
    bb = min(_round_up(max(block_b, 1), 128), b128)  # force multiple of 128
    # If the whole (multi-tile-sized) batch would fit in one step, split in two
    # so dimension_semantics=("parallel",) can feed both v7x TensorCores.
    if b128 > 128 and b128 <= bb:
        bb = max(128, _round_up(-(-b128 // 2), 128))
    b_pad = _round_up(max(batch, 1), bb)
    return bb, b_pad


def _kernel_params(params):
    """Cast PyTorch-layout params to the kernel's dtypes/shapes (done once)."""
    return (
        params["w1"].astype(jnp.bfloat16),                  # (128, n_state)
        params["b1"].reshape(-1, 1).astype(jnp.bfloat16),   # (128, 1)
        params["w2"].astype(jnp.bfloat16),                  # (32, 128)
        params["b2"].reshape(-1, 1).astype(jnp.bfloat16),   # (32, 1)
        params["w3"].astype(jnp.bfloat16),                  # (2, 32)
        params["b3"].reshape(-1, 1).astype(jnp.float32),    # (2, 1)
    )


def dqn_forward_feature_major(x_fm, params, block_b=4096, out_dtype=jnp.float32):
    """Fast path. x_fm: (n_state, B) activations (any float dtype; streamed as bf16).

    Returns (2, B) Q-values in out_dtype (use jnp.bfloat16 to halve writeback
    if the consumer - e.g. greedy argmax - tolerates it).
    """
    n_state, B = x_fm.shape
    bb, b_pad = _pick_tile(B, block_b)

    xT = x_fm.astype(jnp.bfloat16)
    if b_pad != B:
        xT = jnp.pad(xT, ((0, 0), (0, b_pad - B)))

    w1, b1, w2, b2, w3, b3 = _kernel_params(params)

    grid = (b_pad // bb,)

    flops = 2 * b_pad * (n_state * 128 + 128 * 32 + 32 * 2)
    bytes_accessed = (xT.size * 2
                      + b_pad * 2 * jnp.dtype(out_dtype).itemsize
                      + (w1.size + w2.size + w3.size) * 2
                      + (b1.size + b2.size) * 2 + b3.size * 4)

    const = lambda i: (0, 0)  # weights/biases: same block every step -> VMEM-resident
    out_t = pl.pallas_call(
        dqn_kernel,
        out_shape=jax.ShapeDtypeStruct((2, b_pad), out_dtype),
        grid=grid,
        in_specs=[
            pl.BlockSpec((n_state, bb), lambda i: (0, i)),  # x: streamed/pipelined
            pl.BlockSpec(w1.shape, const),
            pl.BlockSpec(b1.shape, const),
            pl.BlockSpec(w2.shape, const),
            pl.BlockSpec(b2.shape, const),
            pl.BlockSpec(w3.shape, const),
            pl.BlockSpec(b3.shape, const),
        ],
        out_specs=pl.BlockSpec((2, bb), lambda i: (0, i)),  # lane-dense writeback
        compiler_params=pltpu.CompilerParams(
            dimension_semantics=("parallel",)),
        cost_estimate=pl.CostEstimate(flops=flops, transcendentals=0,
                                      bytes_accessed=bytes_accessed),
    )(xT, w1, b1, w2, b2, w3, b3)

    return out_t[:, :B]


def dqn_forward(x, params, block_b=4096, out_dtype=jnp.float32):
    """PyTorch-layout wrapper. x: (B, n_state) float32 -> (B, 2).

    Note: x / w2 / w3 / w1 are quantized to bf16 inside the kernel; fine for
    greedy action selection, document/gate if reused for Q-target training.
    """
    out_fm = dqn_forward_feature_major(x.T, params, block_b=block_b,
                                       out_dtype=out_dtype)
    return out_fm.T


def init_params(key, n_state):
    """PyTorch nn.Linear-style init, stored in PyTorch (out_features, in_features) layout."""
    def linear(k, fan_in, fan_out):
        kw, kb = jax.random.split(k)
        bound = 1.0 / jnp.sqrt(fan_in)
        w = jax.random.uniform(kw, (fan_out, fan_in), jnp.float32, -bound, bound)
        b = jax.random.uniform(kb, (fan_out,), jnp.float32, -bound, bound)
        return w, b

    k1, k2, k3 = jax.random.split(key, 3)
    w1, b1 = linear(k1, n_state, 128)
    w2, b2 = linear(k2, 128, 32)
    w3, b3 = linear(k3, 32, 2)
    return {"w1": w1, "b1": b1, "w2": w2, "b2": b2, "w3": w3, "b3": b3}


def dqn_reference_f32(x, p):
    """Pure f32 reference (PyTorch semantics)."""
    h1 = jnp.maximum(x @ p["w1"].T + p["b1"], 0.0)
    h2 = jnp.maximum(h1 @ p["w2"].T + p["b2"], 0.0)
    return h2 @ p["w3"].T + p["b3"]


def dqn_reference_mixed(x, p):
    """Reference matching the kernel's mixed precision (bf16 stream/epilogue, f32 acc)."""
    xb = x.astype(jnp.bfloat16)
    w1 = p["w1"].astype(jnp.bfloat16); b1 = p["b1"].astype(jnp.bfloat16)
    w2 = p["w2"].astype(jnp.bfloat16); b2 = p["b2"].astype(jnp.bfloat16)
    w3 = p["w3"].astype(jnp.bfloat16)
    h1 = jnp.dot(xb, w1.T, preferred_element_type=jnp.float32).astype(jnp.bfloat16)
    h1 = jnp.maximum(h1 + b1, 0)
    h2 = jnp.dot(h1, w2.T, preferred_element_type=jnp.float32).astype(jnp.bfloat16)
    h2 = jnp.maximum(h2 + b2, 0)
    return jnp.dot(h2, w3.T, preferred_element_type=jnp.float32) + p["b3"]


if __name__ == "__main__":
    key = jax.random.PRNGKey(0)
    kp, kx1, kx2 = jax.random.split(key, 3)

    n_state = 4  # e.g. CartPole observation dim
    params = init_params(kp, n_state)

    fwd = jax.jit(lambda xx: dqn_forward(xx, params))

    # Small batch: single grid step, padded to one 128-wide lane tile.
    x_small = jax.random.normal(kx1, (8, n_state), jnp.float32)
    out_small = jax.block_until_ready(fwd(x_small))
    assert out_small.shape == (8, 2)
    assert jnp.allclose(out_small, dqn_reference_mixed(x_small, params),
                        atol=2e-2, rtol=2e-2)
    assert jnp.allclose(out_small, dqn_reference_f32(x_small, params),
                        atol=1e-1, rtol=1e-1)

    # Batch not divisible by 128: exercises >=2-step grid + lane padding.
    x_big = jax.random.normal(kx2, (260, n_state), jnp.float32)
    out_big = jax.block_until_ready(fwd(x_big))
    assert out_big.shape == (260, 2)
    assert jnp.allclose(out_big, dqn_reference_mixed(x_big, params),
                        atol=2e-2, rtol=2e-2)
    assert jnp.allclose(out_big, dqn_reference_f32(x_big, params),
                        atol=1e-1, rtol=1e-1)

    print("KERNEL_OK")
</pallas_src>

<mosaic_0001>
module attributes {stable_mosaic.version = 11 : i64} {
  func.func @dqn_kernel(%arg0: i32, %arg1: memref<4x128xbf16, #tpu.memory_space<vmem>>, %arg2: memref<128x4xbf16, #tpu.memory_space<vmem>>, %arg3: memref<128x1xbf16, #tpu.memory_space<vmem>>, %arg4: memref<32x128xbf16, #tpu.memory_space<vmem>>, %arg5: memref<32x1xbf16, #tpu.memory_space<vmem>>, %arg6: memref<2x32xbf16, #tpu.memory_space<vmem>>, %arg7: memref<2x1xf32, #tpu.memory_space<vmem>>, %arg8: memref<2x128xf32, #tpu.memory_space<vmem>>) attributes {dimension_semantics = [#tpu.dimension_semantics<parallel>], iteration_bounds = array<i64: 1>, scalar_prefetch = 0 : i64, scratch_operands = 0 : i64, tpu.core_type = #tpu.core_type<tc>, window_params = [{transform_indices = @transform_0, window_bounds = array<i64: 4, 128>}, {pipeline_mode = #tpu.pipeline_mode<synchronous>, transform_indices = @transform_1, window_bounds = array<i64: 128, 4>}, {pipeline_mode = #tpu.pipeline_mode<synchronous>, transform_indices = @transform_2, window_bounds = array<i64: 128, 1>}, {pipeline_mode = #tpu.pipeline_mode<synchronous>, transform_indices = @transform_3, window_bounds = array<i64: 32, 128>}, {pipeline_mode = #tpu.pipeline_mode<synchronous>, transform_indices = @transform_4, window_bounds = array<i64: 32, 1>}, {pipeline_mode = #tpu.pipeline_mode<synchronous>, transform_indices = @transform_5, window_bounds = array<i64: 2, 32>}, {pipeline_mode = #tpu.pipeline_mode<synchronous>, transform_indices = @transform_6, window_bounds = array<i64: 2, 1>}, {transform_indices = @transform_7, window_bounds = array<i64: 2, 128>}]} {
    %c0 = arith.constant 0 : index
    %c0_0 = arith.constant 0 : index
    %0 = vector.load %arg1[%c0, %c0_0] : memref<4x128xbf16, #tpu.memory_space<vmem>>, vector<4x128xbf16>
    %c0_1 = arith.constant 0 : index
    %c0_2 = arith.constant 0 : index
    %1 = vector.load %arg2[%c0_1, %c0_2] : memref<128x4xbf16, #tpu.memory_space<vmem>>, vector<128x4xbf16>
    %cst = arith.constant dense<0.000000e+00> : vector<128x128xf32>
    %2 = tpu.matmul %1, %0, %cst {dimension_numbers = #tpu.dot_dimension_numbers<[1], [0], [0], [1], [0, 0, 1, 1], [], []>} : vector<128x4xbf16>, vector<4x128xbf16>, vector<128x128xf32> -> vector<128x128xf32>
    %3 = arith.truncf %2 : vector<128x128xf32> to vector<128x128xbf16>
    %c0_3 = arith.constant 0 : index
    %c0_4 = arith.constant 0 : index
    %4 = vector.load %arg3[%c0_3, %c0_4] : memref<128x1xbf16, #tpu.memory_space<vmem>>, vector<128x1xbf16>
    %5 = vector.broadcast %4 : vector<128x1xbf16> to vector<128x128xbf16>
    %6 = arith.addf %3, %5 : vector<128x128xbf16>
    %cst_5 = arith.constant 0.000000e+00 : bf16
    %7 = vector.broadcast %cst_5 : bf16 to vector<128x128xbf16>
    %8 = arith.maximumf %6, %7 : vector<128x128xbf16>
    %c0_6 = arith.constant 0 : index
    %c0_7 = arith.constant 0 : index
    %9 = vector.load %arg4[%c0_6, %c0_7] : memref<32x128xbf16, #tpu.memory_space<vmem>>, vector<32x128xbf16>
    %cst_8 = arith.constant dense<0.000000e+00> : vector<32x128xf32>
    %10 = tpu.matmul %9, %8, %cst_8 {dimension_numbers = #tpu.dot_dimension_numbers<[1], [0], [0], [1], [0, 0, 1, 1], [], []>} : vector<32x128xbf16>, vector<128x128xbf16>, vector<32x128xf32> -> vector<32x128xf32>
    %11 = arith.truncf %10 : vector<32x128xf32> to vector<32x128xbf16>
    %c0_9 = arith.constant 0 : index
    %c0_10 = arith.constant 0 : index
    %12 = vector.load %arg5[%c0_9, %c0_10] : memref<32x1xbf16, #tpu.memory_space<vmem>>, vector<32x1xbf16>
    %13 = vector.broadcast %12 : vector<32x1xbf16> to vector<32x128xbf16>
    %14 = arith.addf %11, %13 : vector<32x128xbf16>
    %cst_11 = arith.constant 0.000000e+00 : bf16
    %15 = vector.broadcast %cst_11 : bf16 to vector<32x128xbf16>
    %16 = arith.maximumf %14, %15 : vector<32x128xbf16>
    %c0_12 = arith.constant 0 : index
    %c0_13 = arith.constant 0 : index
    %17 = vector.load %arg6[%c0_12, %c0_13] : memref<2x32xbf16, #tpu.memory_space<vmem>>, vector<2x32xbf16>
    %cst_14 = arith.constant dense<0.000000e+00> : vector<2x128xf32>
    %18 = tpu.matmul %17, %16, %cst_14 {dimension_numbers = #tpu.dot_dimension_numbers<[1], [0], [0], [1], [0, 0, 1, 1], [], []>} : vector<2x32xbf16>, vector<32x128xbf16>, vector<2x128xf32> -> vector<2x128xf32>
    %c0_15 = arith.constant 0 : index
    %c0_16 = arith.constant 0 : index
    %19 = vector.load %arg7[%c0_15, %c0_16] : memref<2x1xf32, #tpu.memory_space<vmem>>, vector<2x1xf32>
    %20 = vector.broadcast %19 : vector<2x1xf32> to vector<2x128xf32>
    %21 = arith.addf %18, %20 : vector<2x128xf32>
    %c0_17 = arith.constant 0 : index
    %c0_18 = arith.constant 0 : index
    %22 = vector.load %arg8[%c0_17, %c0_18] : memref<2x128xf32, #tpu.memory_space<vmem>>, vector<2x128xf32>
    tpu.vector_store %arg8[%c0_17, %c0_18], %21 {strides = array<i32>} : memref<2x128xf32, #tpu.memory_space<vmem>>, vector<2x128xf32>,
    return
  }
  func.func @transform_0(%arg0: i32) -> (i32, i32) {
    %c0_i32 = arith.constant 0 : i32
    %c0_i32_0 = arith.constant 0 : i32
    return %c0_i32, %arg0 : i32, i32
  }
  func.func @transform_1(%arg0: i32) -> (i32, i32) {
    %c0_i32 = arith.constant 0 : i32
    %c0_i32_0 = arith.constant 0 : i32
    %c0_i32_1 = arith.constant 0 : i32
    return %c0_i32, %c0_i32_0 : i32, i32
  }
  func.func @transform_2(%arg0: i32) -> (i32, i32) {
    %c0_i32 = arith.constant 0 : i32
    %c0_i32_0 = arith.constant 0 : i32
    %c0_i32_1 = arith.constant 0 : i32
    return %c0_i32, %c0_i32_0 : i32, i32
  }
  func.func @transform_3(%arg0: i32) -> (i32, i32) {
    %c0_i32 = arith.constant 0 : i32
    %c0_i32_0 = arith.constant 0 : i32
    %c0_i32_1 = arith.constant 0 : i32
    return %c0_i32, %c0_i32_0 : i32, i32
  }
  func.func @transform_4(%arg0: i32) -> (i32, i32) {
    %c0_i32 = arith.constant 0 : i32
    %c0_i32_0 = arith.constant 0 : i32
    %c0_i32_1 = arith.constant 0 : i32
    return %c0_i32, %c0_i32_0 : i32, i32
  }
  func.func @transform_5(%arg0: i32) -> (i32, i32) {
    %c0_i32 = arith.constant 0 : i32
    %c0_i32_0 = arith.constant 0 : i32
    %c0_i32_1 = arith.constant 0 : i32
    return %c0_i32, %c0_i32_0 : i32, i32
  }
  func.func @transform_6(%arg0: i32) -> (i32, i32) {
    %c0_i32 = arith.constant 0 : i32
    %c0_i32_0 = arith.constant 0 : i32
    %c0_i32_1 = arith.constant 0 : i32
    return %c0_i32, %c0_i32_0 : i32, i32
  }
  func.func @transform_7(%arg0: i32) -> (i32, i32) {
    %c0_i32 = arith.constant 0 : i32
    %c0_i32_0 = arith.constant 0 : i32
    return %c0_i32, %arg0 : i32, i32
  }
}

</mosaic_0001>

<llo_original>
// kernel: _lambda_.1
$region0: #{_lambda_.1}
  #allocation0 [shape = 'u32[]', space=smem, size = 0x4, offset = 0x4, fixed_abs, tag = 'smem constant byte address 0x4 - core index']
  #allocation1 [shape = 'u32[144,128]{1,0:T(1,128)}', space=vmem, size = 0x12000, scoped, tag = 'internal scratch']
  %s0 = inlined_call_operand.vmem [shape: bf16[4,128], index: 0, kind: input, shape index: {}]
  %s1 = inlined_call_operand.hbm [shape: bf16[128,4], index: 1, kind: input, shape index: {}]
  %s2 = inlined_call_operand.hbm [shape: bf16[128,1], index: 2, kind: input, shape index: {}]
  %s3 = inlined_call_operand.vmem [shape: bf16[32,128], index: 3, kind: input, shape index: {}]
  %s4 = inlined_call_operand.vmem [shape: bf16[32,1], index: 4, kind: input, shape index: {}]
  %s5 = inlined_call_operand.vmem [shape: bf16[2,32], index: 5, kind: input, shape index: {}]
  %s6 = inlined_call_operand.hbm [shape: f32[2,1], index: 6, kind: input, shape index: {}]
  %s7 = inlined_call_operand.vmem [shape: f32[2,128], index: 7, kind: output, shape index: {}]
  %s8 = sld [smem:[#allocation0]]
  $region50: #{_lambda_.1} parent=0
    _
  %s10 = ssub.s32 1, %s8
  %s11 = scalar_select 0, %s10, %s8
  $region1: #{_lambda_.1} parent=0
    #allocation2 [shape = 'u8[32768]{0}', space=vmem, size = 0x8000, scoped, tag = 'input window, operand 1, single buffered']
    #allocation3 [shape = 's32[1]{0}', space=sflag, size = 0x4, scoped, tag = 'scoped memory for _lambda_.1']
    #allocation4 [shape = 'u8[32768]{0}', space=vmem, size = 0x8000, scoped, tag = 'input window, operand 2, single buffered']
    #allocation5 [shape = 's32[1]{0}', space=sflag, size = 0x4, scoped, tag = 'scoped memory for _lambda_.1']
    #allocation6 [shape = 'u8[1024]{0}', space=vmem, size = 0x400, scoped, tag = 'input window, operand 6, single buffered']
    %12 = vsyncpa [#allocation3], 0
    %13 = vsyncpa [#allocation5], 0
    // Predicated region
    $region2: #{_lambda_.1} parent=1 // pred_check
      _
    $region3: #{_lambda_.1} parent=1 // pred_check_branch
      %15 = sbr.rel (0) target = $region5
    $region4: #{_lambda_.1} parent=1 // pred_region
      _
    $region5: #{_lambda_.1} parent=1 // pred_fallthru
      _
    // Predicated region
    $region6: #{_lambda_.1} parent=1 // pred_check
      _
    $region7: #{_lambda_.1} parent=1 // pred_check_branch
      %17 = sbr.rel (0) target = $region9
    $region8: #{_lambda_.1} parent=1 // pred_region
      %s19 = ssub.s32 1024, 1024
      %20 = vsyncadd [#allocation3], %s19
      %s21 = sshll.u32 [#allocation2], 4
      %s22 = int_to_ptr.vmem [resolvable:$true] %s21
      %27 = dma.hbm_to_vmem [thread:$0]  %s1, 1024, %s22, [#allocation3], 64, 64, 4
    $region9: #{_lambda_.1} parent=1 // pred_fallthru
      _
    // Predicated region
    $region10: #{_lambda_.1} parent=1 // pred_check
      _
    $region11: #{_lambda_.1} parent=1 // pred_check_branch
      %29 = sbr.rel (0) target = $region13
    $region12: #{_lambda_.1} parent=1 // pred_region
      %s31 = ssub.s32 1024, 1024
      %32 = vsyncadd [#allocation5], %s31
      %s33 = sshll.u32 [#allocation4], 4
      %s34 = int_to_ptr.vmem [resolvable:$true] %s33
      %39 = dma.hbm_to_vmem [thread:$0]  %s2, 1024, %s34, [#allocation5], 64, 64, 4
    $region13: #{_lambda_.1} parent=1 // pred_fallthru
      _
    // Predicated region
    $region14: #{_lambda_.1} parent=1 // pred_check
      _
    $region15: #{_lambda_.1} parent=1 // pred_check_branch
      %41 = sbr.rel (0) target = $region17
    $region16: #{_lambda_.1} parent=1 // pred_region
      _
    $region17: #{_lambda_.1} parent=1 // pred_fallthru
      _
    // Predicated region
    $region18: #{_lambda_.1} parent=1 // pred_check
      _
    $region19: #{_lambda_.1} parent=1 // pred_check_branch
      %43 = sbr.rel (0) target = $region21
    $region20: #{_lambda_.1} parent=1 // pred_region
      _
    $region21: #{_lambda_.1} parent=1 // pred_fallthru
      _
    // Predicated region
    $region22: #{_lambda_.1} parent=1 // pred_check
      _
    $region23: #{_lambda_.1} parent=1 // pred_check_branch
      %45 = sbr.rel (0) target = $region25
    $region24: #{_lambda_.1} parent=1 // pred_region
      _
    $region25: #{_lambda_.1} parent=1 // pred_fallthru
      _
    // Predicated region
    $region26: #{_lambda_.1} parent=1 // pred_check
      _
    $region27: #{_lambda_.1} parent=1 // pred_check_branch
      %47 = sbr.rel (0) target = $region29
    $region28: #{_lambda_.1} parent=1 // pred_region
      %s49 = ssub.s32 32, 32
      %50 = vsyncadd [#allocation5], %s49
      %s52 = sshll.u32 [#allocation6], 4
      %s53 = int_to_ptr.vmem [resolvable:$true] %s52
      %55 = dma.hbm_to_vmem [thread:$0]  %s6, 32, %s53, [#allocation5]
    $region29: #{_lambda_.1} parent=1 // pred_fallthru
      _
    // Predicated region
    $region30: #{_lambda_.1} parent=1 // pred_check
      _
    $region31: #{_lambda_.1} parent=1 // pred_check_branch
      %57 = sbr.rel (0) target = $region33
    $region32: #{_lambda_.1} parent=1 // pred_region
      %58 = dma.done [#allocation3], 1024
    $region33: #{_lambda_.1} parent=1 // pred_fallthru
      _
    // Predicated region
    $region34: #{_lambda_.1} parent=1 // pred_check
      _
    $region35: #{_lambda_.1} parent=1 // pred_check_branch
      %60 = sbr.rel (0) target = $region37
    $region36: #{_lambda_.1} parent=1 // pred_region
      %61 = dma.done [#allocation5], 1024
    $region37: #{_lambda_.1} parent=1 // pred_fallthru
      _
    // Predicated region
    $region38: #{_lambda_.1} parent=1 // pred_check
      _
    $region39: #{_lambda_.1} parent=1 // pred_check_branch
      %63 = sbr.rel (0) target = $region41
    $region40: #{_lambda_.1} parent=1 // pred_region
      %64 = dma.done [#allocation5], 32
    $region41: #{_lambda_.1} parent=1 // pred_fallthru
      _
    %v66 = vld [vmem:[%s0] sm:$0x3]
    %v67 = vld [vmem:[#allocation2] sm:$0xf]
    %v68 = vld [vmem:[#allocation2 + $0x4] sm:$0xf]
    %v69 = vld [vmem:[#allocation2 + $0x8] sm:$0xf]
    %v70 = vld [vmem:[#allocation2 + $0xc] sm:$0xf]
    %v71 = vld [vmem:[#allocation2 + $0x10] sm:$0xf]
    %v72 = vld [vmem:[#allocation2 + $0x14] sm:$0xf]
    %v73 = vld [vmem:[#allocation2 + $0x18] sm:$0xf]
    %v74 = vld [vmem:[#allocation2 + $0x1c] sm:$0xf]
    %v75 = vld [vmem:[#allocation2 + $0x20] sm:$0xf]
    %v76 = vld [vmem:[#allocation2 + $0x24] sm:$0xf]
    %v77 = vld [vmem:[#allocation2 + $0x28] sm:$0xf]
    %v78 = vld [vmem:[#allocation2 + $0x2c] sm:$0xf]
    %v79 = vld [vmem:[#allocation2 + $0x30] sm:$0xf]
    %v80 = vld [vmem:[#allocation2 + $0x34] sm:$0xf]
    %v81 = vld [vmem:[#allocation2 + $0x38] sm:$0xf]
    %v82 = vld [vmem:[#allocation2 + $0x3c] sm:$0xf]
    %v99 = vunpack.c.l.b16 %v67
    %v100 = vunpack.c.l.b16 %v68
    %v101 = vunpack.c.l.b16 %v69
    %v102 = vunpack.c.l.b16 %v70
    %v103 = vunpack.c.l.b16 %v71
    %v104 = vunpack.c.l.b16 %v72
    %v105 = vunpack.c.l.b16 %v73
    %v106 = vunpack.c.l.b16 %v74
    %v107 = vunpack.c.l.b16 %v75
    %v108 = vunpack.c.l.b16 %v76
    %v109 = vunpack.c.l.b16 %v77
    %v110 = vunpack.c.l.b16 %v78
    %v111 = vunpack.c.l.b16 %v79
    %v112 = vunpack.c.l.b16 %v80
    %v113 = vunpack.c.l.b16 %v81
    %v114 = vunpack.c.l.b16 %v82
    %v115 = vpack.c.b16 %v100, %v99
    %v116 = vpack.c.b16 %v102, %v101
    %v117 = vpack.c.b16 %v104, %v103
    %v118 = vpack.c.b16 %v106, %v105
    %v119 = vpack.c.b16 %v108, %v107
    %v120 = vpack.c.b16 %v110, %v109
    %v121 = vpack.c.b16 %v112, %v111
    %v122 = vpack.c.b16 %v114, %v113
    %vm123 = vcmask 31744
    %v125 = vsel %vm123, %v115, 0
    %v128 = vsel %vm123, %v116, 0
    %v131 = vsel %vm123, %v117, 0
    %v134 = vsel %vm123, %v118, 0
    %v137 = vsel %vm123, %v119, 0
    %v140 = vsel %vm123, %v120, 0
    %v143 = vsel %vm123, %v121, 0
    %v146 = vsel %vm123, %v122, 0
    %vm148 = vcmask 1041408
    %v150 = vsel %vm148, %v66, 0
    %152 = vmatprep.subr.bf16.mxu0 0
    %153 = vmatpush1.bf16.msra.mxu0 %v150
    %154 = vmatprep.subr.bf16.mxu0 0
    %155 = vmatpush1.bf16.msra.mxu0 0
    %156 = vmatprep.subr.bf16.mxu0 0
    %157 = vmatpush1.bf16.msra.mxu0 0
    %158 = vmatprep.subr.bf16.mxu0 0
    %159 = vmatpush1.bf16.msra.mxu0 0
    %160 = vmatprep.subr.bf16.mxu0 0
    %161 = vmatpush1.bf16.msra.mxu0 0
    %162 = vmatprep.subr.bf16.mxu0 0
    %163 = vmatpush1.bf16.msra.mxu0 0
    %164 = vmatprep.subr.bf16.mxu0 0
    %165 = vmatpush1.bf16.msra.mxu0 0
    %166 = vmatprep.subr.bf16.mxu0 0
    %167 = vmatpush1.bf16.msra.mxu0 0
    %168 = vmatprep.subr.bf16.mxu0 0
    %169 = vmatpush1.bf16.msra.mxu0 0
    %170 = vmatprep.subr.bf16.mxu0 0
    %171 = vmatpush1.bf16.msra.mxu0 0
    %172 = vmatprep.subr.bf16.mxu0 0
    %173 = vmatpush1.bf16.msra.mxu0 0
    %174 = vmatprep.subr.bf16.mxu0 0
    %175 = vmatpush1.bf16.msra.mxu0 0
    %176 = vmatprep.subr.bf16.mxu0 0
    %177 = vmatpush1.bf16.msra.mxu0 0
    %178 = vmatprep.subr.bf16.mxu0 0
    %179 = vmatpush1.bf16.msra.mxu0 0
    %180 = vmatprep.subr.bf16.mxu0 0
    %181 = vmatpush1.bf16.msra.mxu0 0
    %182 = vmatprep.subr.bf16.mxu0 0
    %183 = vmatpush1.bf16.msra.mxu0 0
    %184 = vmatprep.mubr.bf16.mxu0 0
    %185 = vmatmul.mubr.bf16.gmra.mrb[0].mxu0 %v125
    %v186 = vpop.f32.mrb[0].mxu0
    %v187 = vadd.f32 0.0, %v186
    %v188 = vpop.f32.mrb[0].mxu0
    %v189 = vpop.f32.mrb[0].mxu0
    %v190 = vadd.f32 0.0, %v189
    %v191 = vpop.f32.mrb[0].mxu0
    %192 = vmatprep.mubr.bf16.mxu0 0
    %193 = vmatmul.mubr.bf16.gmra.mrb[0].mxu0 %v128
    %v194 = vpop.f32.mrb[0].mxu0
    %v195 = vadd.f32 0.0, %v194
    %v196 = vpop.f32.mrb[0].mxu0
    %v197 = vpop.f32.mrb[0].mxu0
    %v198 = vadd.f32 0.0, %v197
    %v199 = vpop.f32.mrb[0].mxu0
    %200 = vmatprep.mubr.bf16.mxu0 0
    %201 = vmatmul.mubr.bf16.gmra.mrb[0].mxu0 %v131
    %v202 = vpop.f32.mrb[0].mxu0
    %v203 = vadd.f32 0.0, %v202
    %v204 = vpop.f32.mrb[0].mxu0
    %v205 = vpop.f32.mrb[0].mxu0
    %v206 = vadd.f32 0.0, %v205
    %v207 = vpop.f32.mrb[0].mxu0
    %208 = vmatprep.mubr.bf16.mxu0 0
    %209 = vmatmul.mubr.bf16.gmra.mrb[0].mxu0 %v134
    %v210 = vpop.f32.mrb[0].mxu0
    %v211 = vadd.f32 0.0, %v210
    %v212 = vpop.f32.mrb[0].mxu0
    %v213 = vpop.f32.mrb[0].mxu0
    %v214 = vadd.f32 0.0, %v213
    %v215 = vpop.f32.mrb[0].mxu0
    %216 = vmatprep.mubr.bf16.mxu0 0
    %217 = vmatmul.mubr.bf16.gmra.mrb[0].mxu0 %v137
    %v218 = vpop.f32.mrb[0].mxu0
    %v219 = vadd.f32 0.0, %v218
    %v220 = vpop.f32.mrb[0].mxu0
    %v221 = vpop.f32.mrb[0].mxu0
    %v222 = vadd.f32 0.0, %v221
    %v223 = vpop.f32.mrb[0].mxu0
    %224 = vmatprep.mubr.bf16.mxu0 0
    %225 = vmatmul.mubr.bf16.gmra.mrb[0].mxu0 %v140
    %v226 = vpop.f32.mrb[0].mxu0
    %v227 = vadd.f32 0.0, %v226
    %v228 = vpop.f32.mrb[0].mxu0
    %v229 = vpop.f32.mrb[0].mxu0
    %v230 = vadd.f32 0.0, %v229
    %v231 = vpop.f32.mrb[0].mxu0
    %232 = vmatprep.mubr.bf16.mxu0 0
    %233 = vmatmul.mubr.bf16.gmra.mrb[0].mxu0 %v143
    %v234 = vpop.f32.mrb[0].mxu0
    %v235 = vadd.f32 0.0, %v234
    %v236 = vpop.f32.mrb[0].mxu0
    %v237 = vpop.f32.mrb[0].mxu0
    %v238 = vadd.f32 0.0, %v237
    %v239 = vpop.f32.mrb[0].mxu0
    %240 = vmatprep.mubr.bf16.mxu0 0
    %241 = vmatmul.mubr.bf16.gmra.mrb[0].mxu0 %v146
    %v242 = vpop.f32.mrb[0].mxu0
    %v243 = vadd.f32 0.0, %v242
    %v244 = vpop.f32.mrb[0].mxu0
    %v245 = vpop.f32.mrb[0].mxu0
    %v246 = vadd.f32 0.0, %v245
    %v247 = vpop.f32.mrb[0].mxu0
    %248 = vdwg.mxu0
    %v249 = vpack.c.bf16 %v190, %v187
    %v250 = vpack.c.bf16 %v198, %v195
    %v251 = vpack.c.bf16 %v206, %v203
    %v252 = vpack.c.bf16 %v214, %v211
    %v253 = vpack.c.bf16 %v222, %v219
    %v254 = vpack.c.bf16 %v230, %v227
    %v255 = vpack.c.bf16 %v238, %v235
    %v256 = vpack.c.bf16 %v246, %v243
    %v257 = vld [vmem:[#allocation4] sm:$0xf]
    %v258 = vld [vmem:[#allocation4 + $0x4] sm:$0xf]
    %v259 = vld [vmem:[#allocation4 + $0x8] sm:$0xf]
    %v260 = vld [vmem:[#allocation4 + $0xc] sm:$0xf]
    %v261 = vld [vmem:[#allocation4 + $0x10] sm:$0xf]
    %v262 = vld [vmem:[#allocation4 + $0x14] sm:$0xf]
    %v263 = vld [vmem:[#allocation4 + $0x18] sm:$0xf]
    %v264 = vld [vmem:[#allocation4 + $0x1c] sm:$0xf]
    %v265 = vld [vmem:[#allocation4 + $0x20] sm:$0xf]
    %v266 = vld [vmem:[#allocation4 + $0x24] sm:$0xf]
    %v267 = vld [vmem:[#allocation4 + $0x28] sm:$0xf]
    %v268 = vld [vmem:[#allocation4 + $0x2c] sm:$0xf]
    %v269 = vld [vmem:[#allocation4 + $0x30] sm:$0xf]
    %v270 = vld [vmem:[#allocation4 + $0x34] sm:$0xf]
    %v271 = vld [vmem:[#allocation4 + $0x38] sm:$0xf]
    %v272 = vld [vmem:[#allocation4 + $0x3c] sm:$0xf]
    %274 = vset.pattern.permute.xlu0 0
    %275 = vperm.xlu0 %274, %v257
    %v276 = vpop.permute.xlu0 %275
    %v279 = vunpack.c.l.s4 839922192
    %v280 = vunpack.c.0.s8 %v279
    %v281 = vlaneseq
    %v282 = vshrl.u32 %v281, 7
    %v283 = vsub.s32 %v280, %v282
    %v284 = vrot.slane %v276, %v283
    %286 = vset.pattern.permute.xlu0 0
    %287 = vperm.xlu0 %286, %v258
    %v288 = vpop.permute.xlu0 %287
    %v291 = vunpack.c.l.s4 839922192
    %v292 = vunpack.c.0.s8 %v291
    %v293 = vlaneseq
    %v294 = vshrl.u32 %v293, 7
    %v295 = vsub.s32 %v292, %v294
    %v296 = vrot.slane %v288, %v295
    %298 = vset.pattern.permute.xlu0 0
    %299 = vperm.xlu0 %298, %v259
    %v300 = vpop.permute.xlu0 %299
    %v303 = vunpack.c.l.s4 839922192
    %v304 = vunpack.c.0.s8 %v303
    %v305 = vlaneseq
    %v306 = vshrl.u32 %v305, 7
    %v307 = vsub.s32 %v304, %v306
    %v308 = vrot.slane %v300, %v307
    %310 = vset.pattern.permute.xlu0 0
    %311 = vperm.xlu0 %310, %v260
    %v312 = vpop.permute.xlu0 %311
    %v315 = vunpack.c.l.s4 839922192
    %v316 = vunpack.c.0.s8 %v315
    %v317 = vlaneseq
    %v318 = vshrl.u32 %v317, 7
    %v319 = vsub.s32 %v316, %v318
    %v320 = vrot.slane %v312, %v319
    %322 = vset.pattern.permute.xlu0 0
    %323 = vperm.xlu0 %322, %v261
    %v324 = vpop.permute.xlu0 %323
    %v327 = vunpack.c.l.s4 839922192
    %v328 = vunpack.c.0.s8 %v327
    %v329 = vlaneseq
    %v330 = vshrl.u32 %v329, 7
    %v331 = vsub.s32 %v328, %v330
    %v332 = vrot.slane %v324, %v331
    %334 = vset.pattern.permute.xlu0 0
    %335 = vperm.xlu0 %334, %v262
    %v336 = vpop.permute.xlu0 %335
    %v339 = vunpack.c.l.s4 839922192
    %v340 = vunpack.c.0.s8 %v339
    %v341 = vlaneseq
    %v342 = vshrl.u32 %v341, 7
    %v343 = vsub.s32 %v340, %v342
    %v344 = vrot.slane %v336, %v343
    %346 = vset.pattern.permute.xlu0 0
    %347 = vperm.xlu0 %346, %v263
    %v348 = vpop.permute.xlu0 %347
    %v351 = vunpack.c.l.s4 839922192
    %v352 = vunpack.c.0.s8 %v351
    %v353 = vlaneseq
    %v354 = vshrl.u32 %v353, 7
    %v355 = vsub.s32 %v352, %v354
    %v356 = vrot.slane %v348, %v355
    %358 = vset.pattern.permute.xlu0 0
    %359 = vperm.xlu0 %358, %v264
    %v360 = vpop.permute.xlu0 %359
    %v363 = vunpack.c.l.s4 839922192
    %v364 = vunpack.c.0.s8 %v363
    %v365 = vlaneseq
    %v366 = vshrl.u32 %v365, 7
    %v367 = vsub.s32 %v364, %v366
    %v368 = vrot.slane %v360, %v367
    %370 = vset.pattern.permute.xlu0 0
    %371 = vperm.xlu0 %370, %v265
    %v372 = vpop.permute.xlu0 %371
    %v375 = vunpack.c.l.s4 839922192
    %v376 = vunpack.c.0.s8 %v375
    %v377 = vlaneseq
    %v378 = vshrl.u32 %v377, 7
    %v379 = vsub.s32 %v376, %v378
    %v380 = vrot.slane %v372, %v379
    %382 = vset.pattern.permute.xlu0 0
    %383 = vperm.xlu0 %382, %v266
    %v384 = vpop.permute.xlu0 %383
    %v387 = vunpack.c.l.s4 839922192
    %v388 = vunpack.c.0.s8 %v387
    %v389 = vlaneseq
    %v390 = vshrl.u32 %v389, 7
    %v391 = vsub.s32 %v388, %v390
    %v392 = vrot.slane %v384, %v391
    %394 = vset.pattern.permute.xlu0 0
    %395 = vperm.xlu0 %394, %v267
    %v396 = vpop.permute.xlu0 %395
    %v399 = vunpack.c.l.s4 839922192
    %v400 = vunpack.c.0.s8 %v399
    %v401 = vlaneseq
    %v402 = vshrl.u32 %v401, 7
    %v403 = vsub.s32 %v400, %v402
    %v404 = vrot.slane %v396, %v403
    %406 = vset.pattern.permute.xlu0 0
    %407 = vperm.xlu0 %406, %v268
    %v408 = vpop.permute.xlu0 %407
    %v411 = vunpack.c.l.s4 839922192
    %v412 = vunpack.c.0.s8 %v411
    %v413 = vlaneseq
    %v414 = vshrl.u32 %v413, 7
    %v415 = vsub.s32 %v412, %v414
    %v416 = vrot.slane %v408, %v415
    %418 = vset.pattern.permute.xlu0 0
    %419 = vperm.xlu0 %418, %v269
    %v420 = vpop.permute.xlu0 %419
    %v423 = vunpack.c.l.s4 839922192
    %v424 = vunpack.c.0.s8 %v423
    %v425 = vlaneseq
    %v426 = vshrl.u32 %v425, 7
    %v427 = vsub.s32 %v424, %v426
    %v428 = vrot.slane %v420, %v427
    %430 = vset.pattern.permute.xlu0 0
    %431 = vperm.xlu0 %430, %v270
    %v432 = vpop.permute.xlu0 %431
    %v435 = vunpack.c.l.s4 839922192
    %v436 = vunpack.c.0.s8 %v435
    %v437 = vlaneseq
    %v438 = vshrl.u32 %v437, 7
    %v439 = vsub.s32 %v436, %v438
    %v440 = vrot.slane %v432, %v439
    %442 = vset.pattern.permute.xlu0 0
    %443 = vperm.xlu0 %442, %v271
    %v444 = vpop.permute.xlu0 %443
    %v447 = vunpack.c.l.s4 839922192
    %v448 = vunpack.c.0.s8 %v447
    %v449 = vlaneseq
    %v450 = vshrl.u32 %v449, 7
    %v451 = vsub.s32 %v448, %v450
    %v452 = vrot.slane %v444, %v451
    %454 = vset.pattern.permute.xlu0 0
    %455 = vperm.xlu0 %454, %v272
    %v456 = vpop.permute.xlu0 %455
    %v459 = vunpack.c.l.s4 839922192
    %v460 = vunpack.c.0.s8 %v459
    %v461 = vlaneseq
    %v462 = vshrl.u32 %v461, 7
    %v463 = vsub.s32 %v460, %v462
    %v464 = vrot.slane %v456, %v463
    %v481 = vunpack.c.l.b16 %v284
    %v482 = vunpack.c.l.b16 %v296
    %v483 = vunpack.c.l.b16 %v308
    %v484 = vunpack.c.l.b16 %v320
    %v485 = vunpack.c.l.b16 %v332
    %v486 = vunpack.c.l.b16 %v344
    %v487 = vunpack.c.l.b16 %v356
    %v488 = vunpack.c.l.b16 %v368
    %v489 = vunpack.c.l.b16 %v380
    %v490 = vunpack.c.l.b16 %v392
    %v491 = vunpack.c.l.b16 %v404
    %v492 = vunpack.c.l.b16 %v416
    %v493 = vunpack.c.l.b16 %v428
    %v494 = vunpack.c.l.b16 %v440
    %v495 = vunpack.c.l.b16 %v452
    %v496 = vunpack.c.l.b16 %v464
    %v497 = vpack.c.b16 %v482, %v481
    %v498 = vpack.c.b16 %v484, %v483
    %v499 = vpack.c.b16 %v486, %v485
    %v500 = vpack.c.b16 %v488, %v487
    %v501 = vpack.c.b16 %v490, %v489
    %v502 = vpack.c.b16 %v492, %v491
    %v503 = vpack.c.b16 %v494, %v493
    %v504 = vpack.c.b16 %v496, %v495
    %v513 = vadd.bf16 %v249, %v497
    %v514 = vadd.bf16 %v250, %v498
    %v515 = vadd.bf16 %v251, %v499
    %v516 = vadd.bf16 %v252, %v500
    %v517 = vadd.bf16 %v253, %v501
    %v518 = vadd.bf16 %v254, %v502
    %v519 = vadd.bf16 %v255, %v503
    %v520 = vadd.bf16 %v256, %v504
    %v521 = vmax.bf16 %v513, 0
    %v522 = vmax.bf16 %v514, 0
    %v523 = vmax.bf16 %v515, 0
    %v524 = vmax.bf16 %v516, 0
    %v525 = vmax.bf16 %v517, 0
    %v526 = vmax.bf16 %v518, 0
    %v527 = vmax.bf16 %v519, 0
    %v528 = vmax.bf16 %v520, 0
    %v529 = vld [vmem:[%s3] sm:$0xf]
    %v530 = vld [vmem:[%s3 + $0x4] sm:$0xf]
    %v531 = vld [vmem:[%s3 + $0x8] sm:$0xf]
    %v532 = vld [vmem:[%s3 + $0xc] sm:$0xf]
    %v537 = vunpack.c.l.b16 %v529
    %v538 = vunpack.c.l.b16 %v530
    %v539 = vunpack.c.l.b16 %v531
    %v540 = vunpack.c.l.b16 %v532
    %v541 = vpack.c.b16 %v538, %v537
    %v542 = vpack.c.b16 %v540, %v539
    %545 = vmatprep.subr.bf16.mxu0 0
    %546 = vmatpush1.bf16.msra.mxu0 %v521
    %547 = vmatprep.subr.bf16.mxu0 0
    %548 = vmatpush1.bf16.msra.mxu0 %v522
    %549 = vmatprep.subr.bf16.mxu0 0
    %550 = vmatpush1.bf16.msra.mxu0 %v523
    %551 = vmatprep.subr.bf16.mxu0 0
    %552 = vmatpush1.bf16.msra.mxu0 %v524
    %553 = vmatprep.subr.bf16.mxu0 0
    %554 = vmatpush1.bf16.msra.mxu0 %v525
    %555 = vmatprep.subr.bf16.mxu0 0
    %556 = vmatpush1.bf16.msra.mxu0 %v526
    %557 = vmatprep.subr.bf16.mxu0 0
    %558 = vmatpush1.bf16.msra.mxu0 %v527
    %559 = vmatprep.subr.bf16.mxu0 0
    %560 = vmatpush1.bf16.msra.mxu0 %v528
    %561 = vmatprep.subr.bf16.mxu0 0
    %562 = vmatpush1.bf16.msra.mxu0 0
    %563 = vmatprep.subr.bf16.mxu0 0
    %564 = vmatpush1.bf16.msra.mxu0 0
    %565 = vmatprep.subr.bf16.mxu0 0
    %566 = vmatpush1.bf16.msra.mxu0 0
    %567 = vmatprep.subr.bf16.mxu0 0
    %568 = vmatpush1.bf16.msra.mxu0 0
    %569 = vmatprep.subr.bf16.mxu0 0
    %570 = vmatpush1.bf16.msra.mxu0 0
    %571 = vmatprep.subr.bf16.mxu0 0
    %572 = vmatpush1.bf16.msra.mxu0 0
    %573 = vmatprep.subr.bf16.mxu0 0
    %574 = vmatpush1.bf16.msra.mxu0 0
    %575 = vmatprep.subr.bf16.mxu0 0
    %576 = vmatpush1.bf16.msra.mxu0 0
    %577 = vmatprep.mubr.bf16.mxu0 0
    %578 = vmatmul.mubr.bf16.gmra.mrb[0].mxu0 %v541
    %v579 = vpop.f32.mrb[0].mxu0
    %v580 = vadd.f32 0.0, %v579
    %v581 = vpop.f32.mrb[0].mxu0
    %v582 = vpop.f32.mrb[0].mxu0
    %v583 = vadd.f32 0.0, %v582
    %v584 = vpop.f32.mrb[0].mxu0
    %585 = vmatprep.mubr.bf16.mxu0 0
    %586 = vmatmul.mubr.bf16.gmra.mrb[0].mxu0 %v542
    %v587 = vpop.f32.mrb[0].mxu0
    %v588 = vadd.f32 0.0, %v587
    %v589 = vpop.f32.mrb[0].mxu0
    %v590 = vpop.f32.mrb[0].mxu0
    %v591 = vadd.f32 0.0, %v590
    %v592 = vpop.f32.mrb[0].mxu0
    %593 = vdwg.mxu0
    %v594 = vpack.c.bf16 %v583, %v580
    %v595 = vpack.c.bf16 %v591, %v588
    %v596 = vld [vmem:[%s4] sm:$0xf]
    %v597 = vld [vmem:[%s4 + $0x4] sm:$0xf]
    %v598 = vld [vmem:[%s4 + $0x8] sm:$0xf]
    %v599 = vld [vmem:[%s4 + $0xc] sm:$0xf]
    %601 = vset.pattern.permute.xlu0 0
    %602 = vperm.xlu0 %601, %v596
    %v603 = vpop.permute.xlu0 %602
    %v606 = vunpack.c.l.s4 839922192
    %v607 = vunpack.c.0.s8 %v606
    %v608 = vlaneseq
    %v609 = vshrl.u32 %v608, 7
    %v610 = vsub.s32 %v607, %v609
    %v611 = vrot.slane %v603, %v610
    %613 = vset.pattern.permute.xlu0 0
    %614 = vperm.xlu0 %613, %v597
    %v615 = vpop.permute.xlu0 %614
    %v618 = vunpack.c.l.s4 839922192
    %v619 = vunpack.c.0.s8 %v618
    %v620 = vlaneseq
    %v621 = vshrl.u32 %v620, 7
    %v622 = vsub.s32 %v619, %v621
    %v623 = vrot.slane %v615, %v622
    %625 = vset.pattern.permute.xlu0 0
    %626 = vperm.xlu0 %625, %v598
    %v627 = vpop.permute.xlu0 %626
    %v630 = vunpack.c.l.s4 839922192
    %v631 = vunpack.c.0.s8 %v630
    %v632 = vlaneseq
    %v633 = vshrl.u32 %v632, 7
    %v634 = vsub.s32 %v631, %v633
    %v635 = vrot.slane %v627, %v634
    %637 = vset.pattern.permute.xlu0 0
    %638 = vperm.xlu0 %637, %v599
    %v639 = vpop.permute.xlu0 %638
    %v642 = vunpack.c.l.s4 839922192
    %v643 = vunpack.c.0.s8 %v642
    %v644 = vlaneseq
    %v645 = vshrl.u32 %v644, 7
    %v646 = vsub.s32 %v643, %v645
    %v647 = vrot.slane %v639, %v646
    %v652 = vunpack.c.l.b16 %v611
    %v653 = vunpack.c.l.b16 %v623
    %v654 = vunpack.c.l.b16 %v635
    %v655 = vunpack.c.l.b16 %v647
    %v656 = vpack.c.b16 %v653, %v652
    %v657 = vpack.c.b16 %v655, %v654
    %v660 = vadd.bf16 %v594, %v656
    %v661 = vadd.bf16 %v595, %v657
    %v662 = vmax.bf16 %v660, 0
    %v663 = vmax.bf16 %v661, 0
    %v664 = vld [vmem:[%s5] sm:$0x1]
    %v665 = vld [vmem:[#allocation6] sm:$0x3]
    %667 = vset.pattern.permute.xlu0 0
    %668 = vperm.xlu0 %667, %v665
    %v669 = vpop.permute.xlu0 %668
    %vm671 = vcmask 261120
    %v673 = vsel %vm671, %v664, 0
    %675 = vmatprep.subr.bf16.mxu0 0
    %676 = vmatpush1.bf16.msra.mxu0 %v662
    %677 = vmatprep.subr.bf16.mxu0 0
    %678 = vmatpush1.bf16.msra.mxu0 %v663
    %679 = vmatprep.subr.bf16.mxu0 0
    %680 = vmatpush1.bf16.msra.mxu0 0
    %681 = vmatprep.subr.bf16.mxu0 0
    %682 = vmatpush1.bf16.msra.mxu0 0
    %683 = vmatprep.subr.bf16.mxu0 0
    %684 = vmatpush1.bf16.msra.mxu0 0
    %685 = vmatprep.subr.bf16.mxu0 0
    %686 = vmatpush1.bf16.msra.mxu0 0
    %687 = vmatprep.subr.bf16.mxu0 0
    %688 = vmatpush1.bf16.msra.mxu0 0
    %689 = vmatprep.subr.bf16.mxu0 0
    %690 = vmatpush1.bf16.msra.mxu0 0
    %691 = vmatprep.subr.bf16.mxu0 0
    %692 = vmatpush1.bf16.msra.mxu0 0
    %693 = vmatprep.subr.bf16.mxu0 0
    %694 = vmatpush1.bf16.msra.mxu0 0
    %695 = vmatprep.subr.bf16.mxu0 0
    %696 = vmatpush1.bf16.msra.mxu0 0
    %697 = vmatprep.subr.bf16.mxu0 0
    %698 = vmatpush1.bf16.msra.mxu0 0
    %699 = vmatprep.subr.bf16.mxu0 0
    %700 = vmatpush1.bf16.msra.mxu0 0
    %701 = vmatprep.subr.bf16.mxu0 0
    %702 = vmatpush1.bf16.msra.mxu0 0
    %703 = vmatprep.subr.bf16.mxu0 0
    %704 = vmatpush1.bf16.msra.mxu0 0
    %705 = vmatprep.subr.bf16.mxu0 0
    %706 = vmatpush1.bf16.msra.mxu0 0
    %707 = vmatprep.mubr.bf16.mxu0 0
    %708 = vmatmul.mubr.bf16.gmra.mrb[0].mxu0 %v673
    %v709 = vpop.f32.mrb[0].mxu0
    %v710 = vadd.f32 %v669, %v709
    %v711 = vpop.f32.mrb[0].mxu0
    %v712 = vpop.f32.mrb[0].mxu0
    %v713 = vpop.f32.mrb[0].mxu0
    %714 = vdwg.mxu0
    %715 = vst [vmem:[%s7] sm:$0x3] %v710
    // Predicated region
    $region42: #{_lambda_.1} parent=1 // pred_check
      _
    $region43: #{_lambda_.1} parent=1 // pred_check_branch
      %717 = sbr.rel (0) target = $region45
    $region44: #{_lambda_.1} parent=1 // pred_region
      _
    $region45: #{_lambda_.1} parent=1 // pred_fallthru
      _
    // Predicated region
    $region46: #{_lambda_.1} parent=1 // pred_check
      _
    $region47: #{_lambda_.1} parent=1 // pred_check_branch
      %719 = sbr.rel (0) target = $region49
    $region48: #{_lambda_.1} parent=1 // pred_region
      _
    $region49: #{_lambda_.1} parent=1 // pred_fallthru
      _
    %720 = vsyncpa [#allocation3], 1
    %721 = vsyncpa [#allocation5], 1

</llo_original>
